<compile_context>
chip_gen: v6e
topology: v6e:2x2x1
jax: 0.10.0
libtpu: 0.0.40
codegen_flags: <defaults>
</compile_context>

<pallas_src>
import jax
import jax.numpy as jnp
from jax.experimental import pallas as pl
from jax.experimental.pallas import tpu as pltpu


def bin_soft_attention_kernel(x_ref, w1_ref, b1_ref, w2_ref, b2_ref, o_ref):
    # x : (rows, DIN_P)   bf16   [v | broadcast(q) | zero-pad]
    # w1: (DIN_P, 2*HP)   bf16   block-diag [[Wv, 0], [0, Wq]] (zero-padded)
    # b1: (1, 2*HP)       f32    [bv | bq] (zero-padded)
    # w2: (2*HP, CP)      bf16   [Wcv ; Wcq] (zero-padded)
    # b2: (1, CP)         f32    bc (zero-padded)
    # o : (rows, CP)      f32
    h = jnp.dot(x_ref[...], w1_ref[...], preferred_element_type=jnp.float32)
    h = jnp.maximum(h + b1_ref[...], 0.0)                  # fused v_proj|q_proj (ReLU)

    logits = jnp.dot(h.astype(jnp.bfloat16), w2_ref[...],
                     preferred_element_type=jnp.float32) + b2_ref[...]

    # Original epilogue: sign(sigmoid(x) - 0.5) -> (w+1)/2.
    # sigmoid is monotone so sign(sigmoid(x)-0.5) == sign(x); a compare/select
    # avoids K*C EUP transcendentals. sign(0)=0 -> 0.5 tie behavior preserved.
    o_ref[...] = jnp.where(logits > 0.0, 1.0,
                           jnp.where(logits < 0.0, 0.0, 0.5))


def _round_up(x, m):
    return ((x + m - 1) // m) * m


def bin_soft_attention(v, q, params):
    """v: (B, K, v_dim) f32, q: (B, q_dim) f32 -> (B, K, C) f32."""
    B, K, v_dim = v.shape
    q_dim = q.shape[-1]
    wv, bv, wq, bq, wcv, wcq, bc = params
    H = wv.shape[1]
    C = wcv.shape[1]

    HP = 128                         # padded hidden width per branch (lane-dense)
    CP = _round_up(C, 128)           # padded output channels (lane-dense stores)
    DIN = v_dim + q_dim
    DIN_P = _round_up(DIN, 128)      # padded input feature width

    # ---- pack / pad parameters (pure wrapper plumbing, runs once in XLA) ----
    w1 = jnp.zeros((DIN_P, 2 * HP), jnp.float32)
    w1 = w1.at[:v_dim, :H].set(wv)
    w1 = w1.at[v_dim:v_dim + q_dim, HP:HP + H].set(wq)
    b1 = jnp.zeros((1, 2 * HP), jnp.float32)
    b1 = b1.at[0, :H].set(bv)
    b1 = b1.at[0, HP:HP + H].set(bq)

    w2 = jnp.zeros((2 * HP, CP), jnp.float32)
    w2 = w2.at[:H, :C].set(wcv)
    w2 = w2.at[HP:HP + H, :C].set(wcq)
    b2 = jnp.zeros((1, CP), jnp.float32).at[0, :C].set(bc)

    w1 = w1.astype(jnp.bfloat16)
    w2 = w2.astype(jnp.bfloat16)

    # ---- fold (B, K) into one row axis, broadcast q over the K regions ----
    x = jnp.concatenate(
        [v, jnp.broadcast_to(q[:, None, :], (B, K, q_dim))], axis=-1
    ).reshape(B * K, DIN)
    x = jnp.pad(x, ((0, 0), (0, DIN_P - DIN))).astype(jnp.bfloat16)

    rows = B * K
    ROW_ALIGN = 16                   # bf16 sublane packing / f32 store alignment
    if rows <= 2048:
        row_block = _round_up(rows, ROW_ALIGN)   # single grid step for small B
    else:
        row_block = 1024                         # chunk rows for large batches
    padded_rows = pl.cdiv(rows, row_block) * row_block
    if padded_rows != rows:
        x = jnp.pad(x, ((0, padded_rows - rows), (0, 0)))

    grid = (padded_rows // row_block,)

    out = pl.pallas_call(
        bin_soft_attention_kernel,
        out_shape=jax.ShapeDtypeStruct((padded_rows, CP), jnp.float32),
        grid_spec=pl.GridSpec(
            grid=grid,
            in_specs=[
                pl.BlockSpec((row_block, DIN_P), lambda i: (i, 0)),   # x
                pl.BlockSpec((DIN_P, 2 * HP),    lambda i: (0, 0)),   # W1 slab
                pl.BlockSpec((1, 2 * HP),        lambda i: (0, 0)),   # b1
                pl.BlockSpec((2 * HP, CP),       lambda i: (0, 0)),   # W2 slab
                pl.BlockSpec((1, CP),            lambda i: (0, 0)),   # b2
            ],
            out_specs=pl.BlockSpec((row_block, CP), lambda i: (i, 0)),
        ),
        compiler_params=pltpu.CompilerParams(
            dimension_semantics=("parallel",)),
    )(x, w1, b1, w2, b2)

    # Drop row / channel padding outside the kernel (lane-dense store inside).
    return out[:rows, :C].reshape(B, K, C)


def make_params(key, v_dim, q_dim, num_hid, output_channel):
    ks = jax.random.split(key, 7)
    scale = 0.1
    wv  = scale * jax.random.normal(ks[0], (v_dim, num_hid), jnp.float32)
    bv  = scale * jax.random.normal(ks[1], (num_hid,), jnp.float32)
    wq  = scale * jax.random.normal(ks[2], (q_dim, num_hid), jnp.float32)
    bq  = scale * jax.random.normal(ks[3], (num_hid,), jnp.float32)
    # conv1: Conv2d(2*num_hid, output_channel, 1) -> weight (C, 2H, 1, 1);
    # stored here pre-split and pre-transposed as two (H, C) halves.
    wcv = scale * jax.random.normal(ks[4], (num_hid, output_channel), jnp.float32)
    wcq = scale * jax.random.normal(ks[5], (num_hid, output_channel), jnp.float32)
    bc  = scale * jax.random.normal(ks[6], (output_channel,), jnp.float32)
    return wv, bv, wq, bq, wcv, wcq, bc


if __name__ == "__main__":
    # The module's reshape to (-1, 2H, 7, 7) requires K = 49 regions per image.
    B, K = 2, 49
    v_dim, q_dim, num_hid, output_channel = 32, 24, 32, 36

    key = jax.random.PRNGKey(0)
    kv, kq, kp = jax.random.split(key, 3)
    v = jax.random.normal(kv, (B, K, v_dim), jnp.float32)
    q = jax.random.normal(kq, (B, q_dim), jnp.float32)
    params = make_params(kp, v_dim, q_dim, num_hid, output_channel)

    out = bin_soft_attention(v, q, params)
    jax.block_until_ready(out)

    assert out.shape == (B, K, output_channel)
    assert out.dtype == jnp.float32
    print("KERNEL_OK")
</pallas_src>

<mosaic_0001>
module attributes {stable_mosaic.version = 11 : i64} {
  func.func @bin_soft_attention_kernel(%arg0: i32, %arg1: memref<112x128xbf16, #tpu.memory_space<vmem>>, %arg2: memref<128x256xbf16, #tpu.memory_space<vmem>>, %arg3: memref<1x256xf32, #tpu.memory_space<vmem>>, %arg4: memref<256x128xbf16, #tpu.memory_space<vmem>>, %arg5: memref<1x128xf32, #tpu.memory_space<vmem>>, %arg6: memref<112x128xf32, #tpu.memory_space<vmem>>) attributes {dimension_semantics = [#tpu.dimension_semantics<parallel>], iteration_bounds = array<i64: 1>, scalar_prefetch = 0 : i64, scratch_operands = 0 : i64, tpu.core_type = #tpu.core_type<tc>, window_params = [{transform_indices = @transform_0, window_bounds = array<i64: 112, 128>}, {pipeline_mode = #tpu.pipeline_mode<synchronous>, transform_indices = @transform_1, window_bounds = array<i64: 128, 256>}, {pipeline_mode = #tpu.pipeline_mode<synchronous>, transform_indices = @transform_2, window_bounds = array<i64: 1, 256>}, {pipeline_mode = #tpu.pipeline_mode<synchronous>, transform_indices = @transform_3, window_bounds = array<i64: 256, 128>}, {pipeline_mode = #tpu.pipeline_mode<synchronous>, transform_indices = @transform_4, window_bounds = array<i64: 1, 128>}, {transform_indices = @transform_5, window_bounds = array<i64: 112, 128>}]} {
    %c0 = arith.constant 0 : index
    %c0_0 = arith.constant 0 : index
    %0 = vector.load %arg1[%c0, %c0_0] : memref<112x128xbf16, #tpu.memory_space<vmem>>, vector<112x128xbf16>
    %c0_1 = arith.constant 0 : index
    %c0_2 = arith.constant 0 : index
    %1 = vector.load %arg2[%c0_1, %c0_2] : memref<128x256xbf16, #tpu.memory_space<vmem>>, vector<128x256xbf16>
    %cst = arith.constant dense<0.000000e+00> : vector<112x256xf32>
    %2 = tpu.matmul %0, %1, %cst {dimension_numbers = #tpu.dot_dimension_numbers<[1], [0], [0], [1], [0, 0, 1, 1], [], []>} : vector<112x128xbf16>, vector<128x256xbf16>, vector<112x256xf32> -> vector<112x256xf32>
    %c0_3 = arith.constant 0 : index
    %c0_4 = arith.constant 0 : index
    %3 = vector.load %arg3[%c0_3, %c0_4] : memref<1x256xf32, #tpu.memory_space<vmem>>, vector<1x256xf32>
    %4 = vector.broadcast %3 : vector<1x256xf32> to vector<112x256xf32>
    %5 = arith.addf %2, %4 : vector<112x256xf32>
    %cst_5 = arith.constant 0.000000e+00 : f32
    %6 = vector.broadcast %cst_5 : f32 to vector<112x256xf32>
    %7 = arith.maximumf %5, %6 : vector<112x256xf32>
    %8 = arith.truncf %7 : vector<112x256xf32> to vector<112x256xbf16>
    %c0_6 = arith.constant 0 : index
    %c0_7 = arith.constant 0 : index
    %9 = vector.load %arg4[%c0_6, %c0_7] : memref<256x128xbf16, #tpu.memory_space<vmem>>, vector<256x128xbf16>
    %cst_8 = arith.constant dense<0.000000e+00> : vector<112x128xf32>
    %10 = tpu.matmul %8, %9, %cst_8 {dimension_numbers = #tpu.dot_dimension_numbers<[1], [0], [0], [1], [0, 0, 1, 1], [], []>} : vector<112x256xbf16>, vector<256x128xbf16>, vector<112x128xf32> -> vector<112x128xf32>
    %c0_9 = arith.constant 0 : index
    %c0_10 = arith.constant 0 : index
    %11 = vector.load %arg5[%c0_9, %c0_10] : memref<1x128xf32, #tpu.memory_space<vmem>>, vector<1x128xf32>
    %12 = vector.broadcast %11 : vector<1x128xf32> to vector<112x128xf32>
    %13 = arith.addf %10, %12 : vector<112x128xf32>
    %cst_11 = arith.constant 0.000000e+00 : f32
    %14 = vector.broadcast %cst_11 : f32 to vector<112x128xf32>
    %15 = arith.cmpf ogt, %13, %14 : vector<112x128xf32>
    %cst_12 = arith.constant 0.000000e+00 : f32
    %16 = vector.broadcast %cst_12 : f32 to vector<112x128xf32>
    %17 = arith.cmpf olt, %13, %16 : vector<112x128xf32>
    %cst_13 = arith.constant 0.000000e+00 : f32
    %cst_14 = arith.constant 5.000000e-01 : f32
    %18 = vector.broadcast %cst_13 : f32 to vector<112x128xf32>
    %19 = vector.broadcast %cst_14 : f32 to vector<112x128xf32>
    %20 = arith.select %17, %18, %19 : vector<112x128xi1>, vector<112x128xf32>
    %cst_15 = arith.constant 1.000000e+00 : f32
    %21 = vector.broadcast %cst_15 : f32 to vector<112x128xf32>
    %22 = arith.select %15, %21, %20 : vector<112x128xi1>, vector<112x128xf32>
    %c0_16 = arith.constant 0 : index
    %c0_17 = arith.constant 0 : index
    %23 = vector.load %arg6[%c0_16, %c0_17] : memref<112x128xf32, #tpu.memory_space<vmem>>, vector<112x128xf32>
    tpu.vector_store %arg6[%c0_16, %c0_17], %22 {strides = array<i32>} : memref<112x128xf32, #tpu.memory_space<vmem>>, vector<112x128xf32>,
    return
  }
  func.func @transform_0(%arg0: i32) -> (i32, i32) {
    %c0_i32 = arith.constant 0 : i32
    %c0_i32_0 = arith.constant 0 : i32
    return %arg0, %c0_i32 : i32, i32
  }
  func.func @transform_1(%arg0: i32) -> (i32, i32) {
    %c0_i32 = arith.constant 0 : i32
    %c0_i32_0 = arith.constant 0 : i32
    %c0_i32_1 = arith.constant 0 : i32
    return %c0_i32, %c0_i32_0 : i32, i32
  }
  func.func @transform_2(%arg0: i32) -> (i32, i32) {
    %c0_i32 = arith.constant 0 : i32
    %c0_i32_0 = arith.constant 0 : i32
    %c0_i32_1 = arith.constant 0 : i32
    return %c0_i32, %c0_i32_0 : i32, i32
  }
  func.func @transform_3(%arg0: i32) -> (i32, i32) {
    %c0_i32 = arith.constant 0 : i32
    %c0_i32_0 = arith.constant 0 : i32
    %c0_i32_1 = arith.constant 0 : i32
    return %c0_i32, %c0_i32_0 : i32, i32
  }
  func.func @transform_4(%arg0: i32) -> (i32, i32) {
    %c0_i32 = arith.constant 0 : i32
    %c0_i32_0 = arith.constant 0 : i32
    %c0_i32_1 = arith.constant 0 : i32
    return %c0_i32, %c0_i32_0 : i32, i32
  }
  func.func @transform_5(%arg0: i32) -> (i32, i32) {
    %c0_i32 = arith.constant 0 : i32
    %c0_i32_0 = arith.constant 0 : i32
    return %arg0, %c0_i32 : i32, i32
  }
}

</mosaic_0001>

<llo_original>
// kernel: tpu_custom_call.1
$region0: #{tpu_custom_call.1}
  #allocation0 [shape = 'u32[]', space=smem, size = 0x4, offset = 0x4, fixed_abs, tag = 'smem constant byte address 0x4 - core index']
  #allocation1 [shape = 'u32[144,128]{1,0:T(1,128)}', space=vmem, size = 0x12000, scoped, tag = 'internal scratch']
  %s0 = inlined_call_operand.hbm [shape: bf16[112,128], index: 0, kind: input, shape index: {}]
  %s1 = inlined_call_operand.hbm [shape: bf16[128,256], index: 1, kind: input, shape index: {}]
  %s2 = inlined_call_operand.vmem [shape: f32[1,256], index: 2, kind: input, shape index: {}]
  %s3 = inlined_call_operand.hbm [shape: bf16[256,128], index: 3, kind: input, shape index: {}]
  %s4 = inlined_call_operand.vmem [shape: f32[1,128], index: 4, kind: input, shape index: {}]
  %s5 = inlined_call_operand.hbm [shape: f32[112,128], index: 5, kind: output, shape index: {}]
  %s6 = sld [smem:[#allocation0]]
  $region42: #{tpu_custom_call.1} parent=0
    _
  %s8 = ssub.s32 1, %s6
  %s9 = scalar_select 0, %s8, %s6
  $region1: #{tpu_custom_call.1} parent=0
    #allocation2 [shape = 'u8[28672]{0}', space=vmem, size = 0x7000, scoped, tag = 'input window, operand 0, single buffered']
    #allocation3 [shape = 's32[1]{0}', space=sflag, size = 0x4, scoped, tag = 'scoped memory for tpu_custom_call.1']
    #allocation4 [shape = 's32[1]{0}', space=sflag, size = 0x4, scoped, tag = 'scoped memory for tpu_custom_call.1']
    #allocation5 [shape = 'u8[65536]{0}', space=vmem, size = 0x10000, scoped, tag = 'input window, operand 1, single buffered']
    #allocation6 [shape = 's32[1]{0}', space=sflag, size = 0x4, scoped, tag = 'scoped memory for tpu_custom_call.1']
    #allocation7 [shape = 'u8[65536]{0}', space=vmem, size = 0x10000, scoped, tag = 'input window, operand 3, single buffered']
    #allocation8 [shape = 'u8[57344]{0}', space=vmem, size = 0xe000, scoped, tag = 'output window, operand 0, single buffered']
    %10 = vsyncpa [#allocation3], 0
    %11 = vsyncpa [#allocation6], 0
    %12 = vsyncpa [#allocation4], 0
    // Predicated region
    $region2: #{tpu_custom_call.1} parent=1 // pred_check
      _
    $region3: #{tpu_custom_call.1} parent=1 // pred_check_branch
      %14 = sbr.rel (0) target = $region5
    $region4: #{tpu_custom_call.1} parent=1 // pred_region
      %s16 = ssub.s32 896, 896
      %17 = vsyncadd [#allocation3], %s16
      %s18 = sshll.u32 [#allocation2], 4
      %s19 = int_to_ptr.vmem [resolvable:$true] %s18
      %24 = dma.hbm_to_vmem [thread:$0]  %s0, 896, %s19, [#allocation3], 64, 64, 4
    $region5: #{tpu_custom_call.1} parent=1 // pred_fallthru
      _
    // Predicated region
    $region6: #{tpu_custom_call.1} parent=1 // pred_check
      _
    $region7: #{tpu_custom_call.1} parent=1 // pred_check_branch
      %26 = sbr.rel (0) target = $region9
    $region8: #{tpu_custom_call.1} parent=1 // pred_region
      %s28 = ssub.s32 2048, 2048
      %29 = vsyncadd [#allocation6], %s28
      %s30 = sshll.u32 [#allocation5], 4
      %s31 = int_to_ptr.vmem [resolvable:$true] %s30
      %36 = dma.hbm_to_vmem [thread:$0]  %s1, 2048, %s31, [#allocation6], 128, 128, 8
    $region9: #{tpu_custom_call.1} parent=1 // pred_fallthru
      _
    // Predicated region
    $region10: #{tpu_custom_call.1} parent=1 // pred_check
      _
    $region11: #{tpu_custom_call.1} parent=1 // pred_check_branch
      %38 = sbr.rel (0) target = $region13
    $region12: #{tpu_custom_call.1} parent=1 // pred_region
      _
    $region13: #{tpu_custom_call.1} parent=1 // pred_fallthru
      _
    // Predicated region
    $region14: #{tpu_custom_call.1} parent=1 // pred_check
      _
    $region15: #{tpu_custom_call.1} parent=1 // pred_check_branch
      %40 = sbr.rel (0) target = $region17
    $region16: #{tpu_custom_call.1} parent=1 // pred_region
      %s42 = ssub.s32 2048, 2048
      %43 = vsyncadd [#allocation6], %s42
      %s44 = sshll.u32 [#allocation7], 4
      %s45 = int_to_ptr.vmem [resolvable:$true] %s44
      %50 = dma.hbm_to_vmem [thread:$0]  %s3, 2048, %s45, [#allocation6], 64, 64, 4
    $region17: #{tpu_custom_call.1} parent=1 // pred_fallthru
      _
    // Predicated region
    $region18: #{tpu_custom_call.1} parent=1 // pred_check
      _
    $region19: #{tpu_custom_call.1} parent=1 // pred_check_branch
      %52 = sbr.rel (0) target = $region21
    $region20: #{tpu_custom_call.1} parent=1 // pred_region
      _
    $region21: #{tpu_custom_call.1} parent=1 // pred_fallthru
      _
    // Predicated region
    $region22: #{tpu_custom_call.1} parent=1 // pred_check
      _
    $region23: #{tpu_custom_call.1} parent=1 // pred_check_branch
      %54 = sbr.rel (0) target = $region25
    $region24: #{tpu_custom_call.1} parent=1 // pred_region
      %55 = dma.done [#allocation3], 896
    $region25: #{tpu_custom_call.1} parent=1 // pred_fallthru
      _
    // Predicated region
    $region26: #{tpu_custom_call.1} parent=1 // pred_check
      _
    $region27: #{tpu_custom_call.1} parent=1 // pred_check_branch
      %57 = sbr.rel (0) target = $region29
    $region28: #{tpu_custom_call.1} parent=1 // pred_region
      %58 = dma.done [#allocation6], 2048
    $region29: #{tpu_custom_call.1} parent=1 // pred_fallthru
      _
    // Predicated region
    $region30: #{tpu_custom_call.1} parent=1 // pred_check
      _
    $region31: #{tpu_custom_call.1} parent=1 // pred_check_branch
      %60 = sbr.rel (0) target = $region33
    $region32: #{tpu_custom_call.1} parent=1 // pred_region
      %61 = dma.done [#allocation6], 2048
    $region33: #{tpu_custom_call.1} parent=1 // pred_fallthru
      _
    %v63 = vld [vmem:[#allocation2] sm:$0xf]
    %v64 = vld [vmem:[#allocation2 + $0x4] sm:$0xf]
    %v65 = vld [vmem:[#allocation2 + $0x8] sm:$0xf]
    %v66 = vld [vmem:[#allocation2 + $0xc] sm:$0xf]
    %v67 = vld [vmem:[#allocation2 + $0x10] sm:$0xf]
    %v68 = vld [vmem:[#allocation2 + $0x14] sm:$0xf]
    %v69 = vld [vmem:[#allocation2 + $0x18] sm:$0xf]
    %v70 = vld [vmem:[#allocation2 + $0x1c] sm:$0xf]
    %v71 = vld [vmem:[#allocation2 + $0x20] sm:$0xf]
    %v72 = vld [vmem:[#allocation2 + $0x24] sm:$0xf]
    %v73 = vld [vmem:[#allocation2 + $0x28] sm:$0xf]
    %v74 = vld [vmem:[#allocation2 + $0x2c] sm:$0xf]
    %v75 = vld [vmem:[#allocation2 + $0x30] sm:$0xf]
    %v76 = vld [vmem:[#allocation2 + $0x34] sm:$0xf]
    %v77 = vld [vmem:[#allocation5] sm:$0xff]
    %v78 = vld [vmem:[#allocation5 + $0x8] sm:$0xff]
    %v79 = vld [vmem:[#allocation5 + $0x10] sm:$0xff]
    %v80 = vld [vmem:[#allocation5 + $0x18] sm:$0xff]
    %v81 = vld [vmem:[#allocation5 + $0x20] sm:$0xff]
    %v82 = vld [vmem:[#allocation5 + $0x28] sm:$0xff]
    %v83 = vld [vmem:[#allocation5 + $0x30] sm:$0xff]
    %v84 = vld [vmem:[#allocation5 + $0x38] sm:$0xff]
    %v85 = vld [vmem:[#allocation5 + $0x40] sm:$0xff]
    %v86 = vld [vmem:[#allocation5 + $0x48] sm:$0xff]
    %v87 = vld [vmem:[#allocation5 + $0x50] sm:$0xff]
    %v88 = vld [vmem:[#allocation5 + $0x58] sm:$0xff]
    %v89 = vld [vmem:[#allocation5 + $0x60] sm:$0xff]
    %v90 = vld [vmem:[#allocation5 + $0x68] sm:$0xff]
    %v91 = vld [vmem:[#allocation5 + $0x70] sm:$0xff]
    %v92 = vld [vmem:[#allocation5 + $0x78] sm:$0xff]
    %v93 = vld [vmem:[%s2] sm:$0x3]
    %v95 = vlaneseq
    %v96 = vshrl.u32 %v95, 7
    %v97 = vsub.s32 0, %v96
    %v98 = vrot.slane %v93, %v97
    %v99 = vlaneseq
    %v100 = vshrl.u32 %v99, 7
    %v101 = vsub.s32 1, %v100
    %v102 = vrot.slane %v93, %v101
    %v119 = vunpack.c.l.b16 %v63
    %v120 = vunpack.c.l.b16 %v64
    %v121 = vunpack.c.l.b16 %v65
    %v122 = vunpack.c.l.b16 %v66
    %v123 = vunpack.c.l.b16 %v67
    %v124 = vunpack.c.l.b16 %v68
    %v125 = vunpack.c.l.b16 %v69
    %v126 = vunpack.c.l.b16 %v70
    %v127 = vunpack.c.l.b16 %v71
    %v128 = vunpack.c.l.b16 %v72
    %v129 = vunpack.c.l.b16 %v73
    %v130 = vunpack.c.l.b16 %v74
    %v131 = vunpack.c.l.b16 %v75
    %v132 = vunpack.c.l.b16 %v76
    %v133 = vpack.c.b16 %v120, %v119
    %v134 = vpack.c.b16 %v122, %v121
    %v135 = vpack.c.b16 %v124, %v123
    %v136 = vpack.c.b16 %v126, %v125
    %v137 = vpack.c.b16 %v128, %v127
    %v138 = vpack.c.b16 %v130, %v129
    %v139 = vpack.c.b16 %v132, %v131
    %v163 = vunpack.c.l.b16 %v77
    %v164 = vunpack.c.h.b16 %v77
    %v165 = vunpack.c.l.b16 %v78
    %v166 = vunpack.c.h.b16 %v78
    %v167 = vunpack.c.l.b16 %v79
    %v168 = vunpack.c.h.b16 %v79
    %v169 = vunpack.c.l.b16 %v80
    %v170 = vunpack.c.h.b16 %v80
    %v171 = vunpack.c.l.b16 %v81
    %v172 = vunpack.c.h.b16 %v81
    %v173 = vunpack.c.l.b16 %v82
    %v174 = vunpack.c.h.b16 %v82
    %v175 = vunpack.c.l.b16 %v83
    %v176 = vunpack.c.h.b16 %v83
    %v177 = vunpack.c.l.b16 %v84
    %v178 = vunpack.c.h.b16 %v84
    %v179 = vunpack.c.l.b16 %v85
    %v180 = vunpack.c.h.b16 %v85
    %v181 = vunpack.c.l.b16 %v86
    %v182 = vunpack.c.h.b16 %v86
    %v183 = vunpack.c.l.b16 %v87
    %v184 = vunpack.c.h.b16 %v87
    %v185 = vunpack.c.l.b16 %v88
    %v186 = vunpack.c.h.b16 %v88
    %v187 = vunpack.c.l.b16 %v89
    %v188 = vunpack.c.h.b16 %v89
    %v189 = vunpack.c.l.b16 %v90
    %v190 = vunpack.c.h.b16 %v90
    %v191 = vunpack.c.l.b16 %v91
    %v192 = vunpack.c.h.b16 %v91
    %v193 = vunpack.c.l.b16 %v92
    %v194 = vunpack.c.h.b16 %v92
    %v195 = vpack.c.b16 %v165, %v163
    %v196 = vpack.c.b16 %v166, %v164
    %v197 = vpack.c.b16 %v169, %v167
    %v198 = vpack.c.b16 %v170, %v168
    %v199 = vpack.c.b16 %v173, %v171
    %v200 = vpack.c.b16 %v174, %v172
    %v201 = vpack.c.b16 %v177, %v175
    %v202 = vpack.c.b16 %v178, %v176
    %v203 = vpack.c.b16 %v181, %v179
    %v204 = vpack.c.b16 %v182, %v180
    %v205 = vpack.c.b16 %v185, %v183
    %v206 = vpack.c.b16 %v186, %v184
    %v207 = vpack.c.b16 %v189, %v187
    %v208 = vpack.c.b16 %v190, %v188
    %v209 = vpack.c.b16 %v193, %v191
    %v210 = vpack.c.b16 %v194, %v192
    %227 = vmatprep.subr.bf16.mxu0 %v210
    %228 = vmatpush1.bf16.msra.mxu0 %v209
    %229 = vmatprep.subr.bf16.mxu0 %v208
    %230 = vmatpush1.bf16.msra.mxu0 %v207
    %231 = vmatprep.subr.bf16.mxu0 %v206
    %232 = vmatpush1.bf16.msra.mxu0 %v205
    %233 = vmatprep.subr.bf16.mxu0 %v204
    %234 = vmatpush1.bf16.msra.mxu0 %v203
    %235 = vmatprep.subr.bf16.mxu0 %v202
    %236 = vmatpush1.bf16.msra.mxu0 %v201
    %237 = vmatprep.subr.bf16.mxu0 %v200
    %238 = vmatpush1.bf16.msra.mxu0 %v199
    %239 = vmatprep.subr.bf16.mxu0 %v198
    %240 = vmatpush1.bf16.msra.mxu0 %v197
    %241 = vmatprep.subr.bf16.mxu0 %v196
    %242 = vmatpush1.bf16.msra.mxu0 %v195
    %243 = vmatprep.subr.bf16.mxu0 0
    %244 = vmatpush2.bf16.msra.mxu0 0
    %245 = vmatprep.subr.bf16.mxu0 0
    %246 = vmatpush2.bf16.msra.mxu0 0
    %247 = vmatprep.subr.bf16.mxu0 0
    %248 = vmatpush2.bf16.msra.mxu0 0
    %249 = vmatprep.subr.bf16.mxu0 0
    %250 = vmatpush2.bf16.msra.mxu0 0
    %251 = vmatprep.subr.bf16.mxu0 0
    %252 = vmatpush2.bf16.msra.mxu0 0
    %253 = vmatprep.subr.bf16.mxu0 0
    %254 = vmatpush2.bf16.msra.mxu0 0
    %255 = vmatprep.subr.bf16.mxu0 0
    %256 = vmatpush2.bf16.msra.mxu0 0
    %257 = vmatprep.subr.bf16.mxu0 0
    %258 = vmatpush2.bf16.msra.mxu0 0
    %259 = vmatprep.mubr.bf16.mxu0 0
    %260 = vmatmul.mubr.bf16.gmra.mxu0 %v133
    %v261 = vpop.f32.mrf.mxu0
    %v262 = vadd.f32 %v98, %v261
    %v263 = vpop.f32.mrf.mxu0
    %v264 = vadd.f32 %v102, %v263
    %v265 = vpop.f32.mrf.mxu0
    %v266 = vadd.f32 %v98, %v265
    %v267 = vpop.f32.mrf.mxu0
    %v268 = vadd.f32 %v102, %v267
    %269 = vmatprep.mubr.bf16.mxu0 0
    %270 = vmatmul.mubr.bf16.gmra.mxu0 %v134
    %v271 = vpop.f32.mrf.mxu0
    %v272 = vadd.f32 %v98, %v271
    %v273 = vpop.f32.mrf.mxu0
    %v274 = vadd.f32 %v102, %v273
    %v275 = vpop.f32.mrf.mxu0
    %v276 = vadd.f32 %v98, %v275
    %v277 = vpop.f32.mrf.mxu0
    %v278 = vadd.f32 %v102, %v277
    %279 = vmatprep.mubr.bf16.mxu0 0
    %280 = vmatmul.mubr.bf16.gmra.mxu0 %v135
    %v281 = vpop.f32.mrf.mxu0
    %v282 = vadd.f32 %v98, %v281
    %v283 = vpop.f32.mrf.mxu0
    %v284 = vadd.f32 %v102, %v283
    %v285 = vpop.f32.mrf.mxu0
    %v286 = vadd.f32 %v98, %v285
    %v287 = vpop.f32.mrf.mxu0
    %v288 = vadd.f32 %v102, %v287
    %289 = vmatprep.mubr.bf16.mxu0 0
    %290 = vmatmul.mubr.bf16.gmra.mxu0 %v136
    %v291 = vpop.f32.mrf.mxu0
    %v292 = vadd.f32 %v98, %v291
    %v293 = vpop.f32.mrf.mxu0
    %v294 = vadd.f32 %v102, %v293
    %v295 = vpop.f32.mrf.mxu0
    %v296 = vadd.f32 %v98, %v295
    %v297 = vpop.f32.mrf.mxu0
    %v298 = vadd.f32 %v102, %v297
    %299 = vmatprep.mubr.bf16.mxu0 0
    %300 = vmatmul.mubr.bf16.gmra.mxu0 %v137
    %v301 = vpop.f32.mrf.mxu0
    %v302 = vadd.f32 %v98, %v301
    %v303 = vpop.f32.mrf.mxu0
    %v304 = vadd.f32 %v102, %v303
    %v305 = vpop.f32.mrf.mxu0
    %v306 = vadd.f32 %v98, %v305
    %v307 = vpop.f32.mrf.mxu0
    %v308 = vadd.f32 %v102, %v307
    %309 = vmatprep.mubr.bf16.mxu0 0
    %310 = vmatmul.mubr.bf16.gmra.mxu0 %v138
    %v311 = vpop.f32.mrf.mxu0
    %v312 = vadd.f32 %v98, %v311
    %v313 = vpop.f32.mrf.mxu0
    %v314 = vadd.f32 %v102, %v313
    %v315 = vpop.f32.mrf.mxu0
    %v316 = vadd.f32 %v98, %v315
    %v317 = vpop.f32.mrf.mxu0
    %v318 = vadd.f32 %v102, %v317
    %319 = vmatprep.mubr.bf16.mxu0 0
    %320 = vmatmul.mubr.bf16.gmra.mxu0 %v139
    %v321 = vpop.f32.mrf.mxu0
    %v322 = vadd.f32 %v98, %v321
    %v323 = vpop.f32.mrf.mxu0
    %v324 = vadd.f32 %v102, %v323
    %v325 = vpop.f32.mrf.mxu0
    %v326 = vadd.f32 %v98, %v325
    %v327 = vpop.f32.mrf.mxu0
    %v328 = vadd.f32 %v102, %v327
    %329 = vdwg.mxu0
    %v330 = vmax.f32 %v262, 0.0
    %v331 = vmax.f32 %v264, 0.0
    %v332 = vmax.f32 %v266, 0.0
    %v333 = vmax.f32 %v268, 0.0
    %v334 = vmax.f32 %v272, 0.0
    %v335 = vmax.f32 %v274, 0.0
    %v336 = vmax.f32 %v276, 0.0
    %v337 = vmax.f32 %v278, 0.0
    %v338 = vmax.f32 %v282, 0.0
    %v339 = vmax.f32 %v284, 0.0
    %v340 = vmax.f32 %v286, 0.0
    %v341 = vmax.f32 %v288, 0.0
    %v342 = vmax.f32 %v292, 0.0
    %v343 = vmax.f32 %v294, 0.0
    %v344 = vmax.f32 %v296, 0.0
    %v345 = vmax.f32 %v298, 0.0
    %v346 = vmax.f32 %v302, 0.0
    %v347 = vmax.f32 %v304, 0.0
    %v348 = vmax.f32 %v306, 0.0
    %v349 = vmax.f32 %v308, 0.0
    %v350 = vmax.f32 %v312, 0.0
    %v351 = vmax.f32 %v314, 0.0
    %v352 = vmax.f32 %v316, 0.0
    %v353 = vmax.f32 %v318, 0.0
    %v354 = vmax.f32 %v322, 0.0
    %v355 = vmax.f32 %v324, 0.0
    %v356 = vmax.f32 %v326, 0.0
    %v357 = vmax.f32 %v328, 0.0
    %v358 = vpack.c.bf16 %v332, %v330
    %v359 = vpack.c.bf16 %v333, %v331
    %v360 = vpack.c.bf16 %v336, %v334
    %v361 = vpack.c.bf16 %v337, %v335
    %v362 = vpack.c.bf16 %v340, %v338
    %v363 = vpack.c.bf16 %v341, %v339
    %v364 = vpack.c.bf16 %v344, %v342
    %v365 = vpack.c.bf16 %v345, %v343
    %v366 = vpack.c.bf16 %v348, %v346
    %v367 = vpack.c.bf16 %v349, %v347
    %v368 = vpack.c.bf16 %v352, %v350
    %v369 = vpack.c.bf16 %v353, %v351
    %v370 = vpack.c.bf16 %v356, %v354
    %v371 = vpack.c.bf16 %v357, %v355
    %v372 = vld [vmem:[#allocation7] sm:$0xf]
    %v373 = vld [vmem:[#allocation7 + $0x4] sm:$0xf]
    %v374 = vld [vmem:[#allocation7 + $0x8] sm:$0xf]
    %v375 = vld [vmem:[#allocation7 + $0xc] sm:$0xf]
    %v376 = vld [vmem:[#allocation7 + $0x10] sm:$0xf]
    %v377 = vld [vmem:[#allocation7 + $0x14] sm:$0xf]
    %v378 = vld [vmem:[#allocation7 + $0x18] sm:$0xf]
    %v379 = vld [vmem:[#allocation7 + $0x1c] sm:$0xf]
    %v380 = vld [vmem:[#allocation7 + $0x20] sm:$0xf]
    %v381 = vld [vmem:[#allocation7 + $0x24] sm:$0xf]
    %v382 = vld [vmem:[#allocation7 + $0x28] sm:$0xf]
    %v383 = vld [vmem:[#allocation7 + $0x2c] sm:$0xf]
    %v384 = vld [vmem:[#allocation7 + $0x30] sm:$0xf]
    %v385 = vld [vmem:[#allocation7 + $0x34] sm:$0xf]
    %v386 = vld [vmem:[#allocation7 + $0x38] sm:$0xf]
    %v387 = vld [vmem:[#allocation7 + $0x3c] sm:$0xf]
    %v388 = vld [vmem:[#allocation7 + $0x40] sm:$0xf]
    %v389 = vld [vmem:[#allocation7 + $0x44] sm:$0xf]
    %v390 = vld [vmem:[#allocation7 + $0x48] sm:$0xf]
    %v391 = vld [vmem:[#allocation7 + $0x4c] sm:$0xf]
    %v392 = vld [vmem:[#allocation7 + $0x50] sm:$0xf]
    %v393 = vld [vmem:[#allocation7 + $0x54] sm:$0xf]
    %v394 = vld [vmem:[#allocation7 + $0x58] sm:$0xf]
    %v395 = vld [vmem:[#allocation7 + $0x5c] sm:$0xf]
    %v396 = vld [vmem:[#allocation7 + $0x60] sm:$0xf]
    %v397 = vld [vmem:[#allocation7 + $0x64] sm:$0xf]
    %v398 = vld [vmem:[#allocation7 + $0x68] sm:$0xf]
    %v399 = vld [vmem:[#allocation7 + $0x6c] sm:$0xf]
    %v400 = vld [vmem:[#allocation7 + $0x70] sm:$0xf]
    %v401 = vld [vmem:[#allocation7 + $0x74] sm:$0xf]
    %v402 = vld [vmem:[#allocation7 + $0x78] sm:$0xf]
    %v403 = vld [vmem:[#allocation7 + $0x7c] sm:$0xf]
    %v404 = vld [vmem:[%s4] sm:$0x1]
    %v406 = vlaneseq
    %v407 = vshrl.u32 %v406, 7
    %v408 = vsub.s32 0, %v407
    %v409 = vrot.slane %v404, %v408
    %v443 = vunpack.c.l.b16 %v372
    %v444 = vunpack.c.l.b16 %v373
    %v445 = vunpack.c.l.b16 %v374
    %v446 = vunpack.c.l.b16 %v375
    %v447 = vunpack.c.l.b16 %v376
    %v448 = vunpack.c.l.b16 %v377
    %v449 = vunpack.c.l.b16 %v378
    %v450 = vunpack.c.l.b16 %v379
    %v451 = vunpack.c.l.b16 %v380
    %v452 = vunpack.c.l.b16 %v381
    %v453 = vunpack.c.l.b16 %v382
    %v454 = vunpack.c.l.b16 %v383
    %v455 = vunpack.c.l.b16 %v384
    %v456 = vunpack.c.l.b16 %v385
    %v457 = vunpack.c.l.b16 %v386
    %v458 = vunpack.c.l.b16 %v387
    %v459 = vunpack.c.l.b16 %v388
    %v460 = vunpack.c.l.b16 %v389
    %v461 = vunpack.c.l.b16 %v390
    %v462 = vunpack.c.l.b16 %v391
    %v463 = vunpack.c.l.b16 %v392
    %v464 = vunpack.c.l.b16 %v393
    %v465 = vunpack.c.l.b16 %v394
    %v466 = vunpack.c.l.b16 %v395
    %v467 = vunpack.c.l.b16 %v396
    %v468 = vunpack.c.l.b16 %v397
    %v469 = vunpack.c.l.b16 %v398
    %v470 = vunpack.c.l.b16 %v399
    %v471 = vunpack.c.l.b16 %v400
    %v472 = vunpack.c.l.b16 %v401
    %v473 = vunpack.c.l.b16 %v402
    %v474 = vunpack.c.l.b16 %v403
    %v475 = vpack.c.b16 %v444, %v443
    %v476 = vpack.c.b16 %v446, %v445
    %v477 = vpack.c.b16 %v448, %v447
    %v478 = vpack.c.b16 %v450, %v449
    %v479 = vpack.c.b16 %v452, %v451
    %v480 = vpack.c.b16 %v454, %v453
    %v481 = vpack.c.b16 %v456, %v455
    %v482 = vpack.c.b16 %v458, %v457
    %v483 = vpack.c.b16 %v460, %v459
    %v484 = vpack.c.b16 %v462, %v461
    %v485 = vpack.c.b16 %v464, %v463
    %v486 = vpack.c.b16 %v466, %v465
    %v487 = vpack.c.b16 %v468, %v467
    %v488 = vpack.c.b16 %v470, %v469
    %v489 = vpack.c.b16 %v472, %v471
    %v490 = vpack.c.b16 %v474, %v473
    %507 = vmatprep.subr.bf16.mxu0 0
    %508 = vmatpush1.bf16.msra.mxu0 %v482
    %509 = vmatprep.subr.bf16.mxu0 0
    %510 = vmatpush1.bf16.msra.mxu0 %v481
    %511 = vmatprep.subr.bf16.mxu0 0
    %512 = vmatpush1.bf16.msra.mxu0 %v480
    %513 = vmatprep.subr.bf16.mxu0 0
    %514 = vmatpush1.bf16.msra.mxu0 %v479
    %515 = vmatprep.subr.bf16.mxu0 0
    %516 = vmatpush1.bf16.msra.mxu0 %v478
    %517 = vmatprep.subr.bf16.mxu0 0
    %518 = vmatpush1.bf16.msra.mxu0 %v477
    %519 = vmatprep.subr.bf16.mxu0 0
    %520 = vmatpush1.bf16.msra.mxu0 %v476
    %521 = vmatprep.subr.bf16.mxu0 0
    %522 = vmatpush1.bf16.msra.mxu0 %v475
    %523 = vmatprep.subr.bf16.mxu0 0
    %524 = vmatpush2.bf16.msra.mxu0 %v490
    %525 = vmatprep.subr.bf16.mxu0 0
    %526 = vmatpush2.bf16.msra.mxu0 %v489
    %527 = vmatprep.subr.bf16.mxu0 0
    %528 = vmatpush2.bf16.msra.mxu0 %v488
    %529 = vmatprep.subr.bf16.mxu0 0
    %530 = vmatpush2.bf16.msra.mxu0 %v487
    %531 = vmatprep.subr.bf16.mxu0 0
    %532 = vmatpush2.bf16.msra.mxu0 %v486
    %533 = vmatprep.subr.bf16.mxu0 0
    %534 = vmatpush2.bf16.msra.mxu0 %v485
    %535 = vmatprep.subr.bf16.mxu0 0
    %536 = vmatpush2.bf16.msra.mxu0 %v484
    %537 = vmatprep.subr.bf16.mxu0 0
    %538 = vmatpush2.bf16.msra.mxu0 %v483
    %539 = vmatprep.mubr.bf16.mxu0 %v359
    %540 = vmatmul.mubr.bf16.gmra.mxu0 %v358
    %v541 = vpop.f32.mrf.mxu0
    %v542 = vadd.f32 %v409, %v541
    %v543 = vpop.f32.mrf.mxu0
    %v544 = vpop.f32.mrf.mxu0
    %v545 = vadd.f32 %v409, %v544
    %v546 = vpop.f32.mrf.mxu0
    %547 = vmatprep.mubr.bf16.mxu0 %v361
    %548 = vmatmul.mubr.bf16.gmra.mxu0 %v360
    %v549 = vpop.f32.mrf.mxu0
    %v550 = vadd.f32 %v409, %v549
    %v551 = vpop.f32.mrf.mxu0
    %v552 = vpop.f32.mrf.mxu0
    %v553 = vadd.f32 %v409, %v552
    %v554 = vpop.f32.mrf.mxu0
    %555 = vmatprep.mubr.bf16.mxu0 %v363
    %556 = vmatmul.mubr.bf16.gmra.mxu0 %v362
    %v557 = vpop.f32.mrf.mxu0
    %v558 = vadd.f32 %v409, %v557
    %v559 = vpop.f32.mrf.mxu0
    %v560 = vpop.f32.mrf.mxu0
    %v561 = vadd.f32 %v409, %v560
    %v562 = vpop.f32.mrf.mxu0
    %563 = vmatprep.mubr.bf16.mxu0 %v365
    %564 = vmatmul.mubr.bf16.gmra.mxu0 %v364
    %v565 = vpop.f32.mrf.mxu0
    %v566 = vadd.f32 %v409, %v565
    %v567 = vpop.f32.mrf.mxu0
    %v568 = vpop.f32.mrf.mxu0
    %v569 = vadd.f32 %v409, %v568
    %v570 = vpop.f32.mrf.mxu0
    %571 = vmatprep.mubr.bf16.mxu0 %v367
    %572 = vmatmul.mubr.bf16.gmra.mxu0 %v366
    %v573 = vpop.f32.mrf.mxu0
    %v574 = vadd.f32 %v409, %v573
    %v575 = vpop.f32.mrf.mxu0
    %v576 = vpop.f32.mrf.mxu0
    %v577 = vadd.f32 %v409, %v576
    %v578 = vpop.f32.mrf.mxu0
    %579 = vmatprep.mubr.bf16.mxu0 %v369
    %580 = vmatmul.mubr.bf16.gmra.mxu0 %v368
    %v581 = vpop.f32.mrf.mxu0
    %v582 = vadd.f32 %v409, %v581
    %v583 = vpop.f32.mrf.mxu0
    %v584 = vpop.f32.mrf.mxu0
    %v585 = vadd.f32 %v409, %v584
    %v586 = vpop.f32.mrf.mxu0
    %587 = vmatprep.mubr.bf16.mxu0 %v371
    %588 = vmatmul.mubr.bf16.gmra.mxu0 %v370
    %v589 = vpop.f32.mrf.mxu0
    %v590 = vadd.f32 %v409, %v589
    %v591 = vpop.f32.mrf.mxu0
    %v592 = vpop.f32.mrf.mxu0
    %v593 = vadd.f32 %v409, %v592
    %v594 = vpop.f32.mrf.mxu0
    %595 = vdwg.mxu0
    %vm596 = vcmp.gt.f32.partialorder %v542, 0.0
    %vm597 = vcmp.gt.f32.partialorder %v545, 0.0
    %vm598 = vcmp.gt.f32.partialorder %v550, 0.0
    %vm599 = vcmp.gt.f32.partialorder %v553, 0.0
    %vm600 = vcmp.gt.f32.partialorder %v558, 0.0
    %vm601 = vcmp.gt.f32.partialorder %v561, 0.0
    %vm602 = vcmp.gt.f32.partialorder %v566, 0.0
    %vm603 = vcmp.gt.f32.partialorder %v569, 0.0
    %vm604 = vcmp.gt.f32.partialorder %v574, 0.0
    %vm605 = vcmp.gt.f32.partialorder %v577, 0.0
    %vm606 = vcmp.gt.f32.partialorder %v582, 0.0
    %vm607 = vcmp.gt.f32.partialorder %v585, 0.0
    %vm608 = vcmp.gt.f32.partialorder %v590, 0.0
    %vm609 = vcmp.gt.f32.partialorder %v593, 0.0
    %vm610 = vcmp.lt.f32.partialorder %v542, 0.0
    %vm611 = vcmp.lt.f32.partialorder %v545, 0.0
    %vm612 = vcmp.lt.f32.partialorder %v550, 0.0
    %vm613 = vcmp.lt.f32.partialorder %v553, 0.0
    %vm614 = vcmp.lt.f32.partialorder %v558, 0.0
    %vm615 = vcmp.lt.f32.partialorder %v561, 0.0
    %vm616 = vcmp.lt.f32.partialorder %v566, 0.0
    %vm617 = vcmp.lt.f32.partialorder %v569, 0.0
    %vm618 = vcmp.lt.f32.partialorder %v574, 0.0
    %vm619 = vcmp.lt.f32.partialorder %v577, 0.0
    %vm620 = vcmp.lt.f32.partialorder %v582, 0.0
    %vm621 = vcmp.lt.f32.partialorder %v585, 0.0
    %vm622 = vcmp.lt.f32.partialorder %v590, 0.0
    %vm623 = vcmp.lt.f32.partialorder %v593, 0.0
    %v624 = vsel %vm610, 0.0, 0.5
    %v625 = vsel %vm611, 0.0, 0.5
    %v626 = vsel %vm612, 0.0, 0.5
    %v627 = vsel %vm613, 0.0, 0.5
    %v628 = vsel %vm614, 0.0, 0.5
    %v629 = vsel %vm615, 0.0, 0.5
    %v630 = vsel %vm616, 0.0, 0.5
    %v631 = vsel %vm617, 0.0, 0.5
    %v632 = vsel %vm618, 0.0, 0.5
    %v633 = vsel %vm619, 0.0, 0.5
    %v634 = vsel %vm620, 0.0, 0.5
    %v635 = vsel %vm621, 0.0, 0.5
    %v636 = vsel %vm622, 0.0, 0.5
    %v637 = vsel %vm623, 0.0, 0.5
    %v638 = vsel %vm596, 1.0, %v624
    %v639 = vsel %vm597, 1.0, %v625
    %v640 = vsel %vm598, 1.0, %v626
    %v641 = vsel %vm599, 1.0, %v627
    %v642 = vsel %vm600, 1.0, %v628
    %v643 = vsel %vm601, 1.0, %v629
    %v644 = vsel %vm602, 1.0, %v630
    %v645 = vsel %vm603, 1.0, %v631
    %v646 = vsel %vm604, 1.0, %v632
    %v647 = vsel %vm605, 1.0, %v633
    %v648 = vsel %vm606, 1.0, %v634
    %v649 = vsel %vm607, 1.0, %v635
    %v650 = vsel %vm608, 1.0, %v636
    %v651 = vsel %vm609, 1.0, %v637
    %652 = vst [vmem:[#allocation8] sm:$0xff] %v638
    %653 = vst [vmem:[#allocation8 + $0x8] sm:$0xff] %v639
    %654 = vst [vmem:[#allocation8 + $0x10] sm:$0xff] %v640
    %655 = vst [vmem:[#allocation8 + $0x18] sm:$0xff] %v641
    %656 = vst [vmem:[#allocation8 + $0x20] sm:$0xff] %v642
    %657 = vst [vmem:[#allocation8 + $0x28] sm:$0xff] %v643
    %658 = vst [vmem:[#allocation8 + $0x30] sm:$0xff] %v644
    %659 = vst [vmem:[#allocation8 + $0x38] sm:$0xff] %v645
    %660 = vst [vmem:[#allocation8 + $0x40] sm:$0xff] %v646
    %661 = vst [vmem:[#allocation8 + $0x48] sm:$0xff] %v647
    %662 = vst [vmem:[#allocation8 + $0x50] sm:$0xff] %v648
    %663 = vst [vmem:[#allocation8 + $0x58] sm:$0xff] %v649
    %664 = vst [vmem:[#allocation8 + $0x60] sm:$0xff] %v650
    %665 = vst [vmem:[#allocation8 + $0x68] sm:$0xff] %v651
    // Predicated region
    $region34: #{tpu_custom_call.1} parent=1 // pred_check
      _
    $region35: #{tpu_custom_call.1} parent=1 // pred_check_branch
      %667 = sbr.rel (0) target = $region37
    $region36: #{tpu_custom_call.1} parent=1 // pred_region
      %s669 = ssub.s32 1792, 1792
      %670 = vsyncadd [#allocation4], %s669
      %s671 = sshll.u32 [#allocation8], 4
      %s672 = int_to_ptr.vmem [resolvable:$true] %s671
      %677 = dma.vmem_to_hbm [thread:$0]  %s672, 1792, %s5, [#allocation4], 128, 128, 8
    $region37: #{tpu_custom_call.1} parent=1 // pred_fallthru
      _
    // Predicated region
    $region38: #{tpu_custom_call.1} parent=1 // pred_check
      _
    $region39: #{tpu_custom_call.1} parent=1 // pred_check_branch
      %679 = sbr.rel (0) target = $region41
    $region40: #{tpu_custom_call.1} parent=1 // pred_region
      %680 = dma.done [#allocation4], 1792
    $region41: #{tpu_custom_call.1} parent=1 // pred_fallthru
      _
    %681 = vsyncpa [#allocation3], 1
    %682 = vsyncpa [#allocation6], 1
    %683 = vsyncpa [#allocation4], 1

</llo_original>
